<compile_context>
chip_gen: v5e
topology: v5e:2x2
jax: 0.10.0
libtpu: 0.0.40
codegen_flags: <defaults>
</compile_context>

<pallas_src>
import jax
import jax.numpy as jnp
from jax.experimental import pallas as pl
from jax.experimental.pallas import tpu as pltpu


def _round_up(x, m):
    return ((x + m - 1) // m) * m


def prepare_bit_weight(weight):
    """Binarize ONCE (matches torch.sign: sign(0) == 0), transpose to (K, N),
    store in bf16 (+/-1 and 0 are exact). Hoist this out of the hot path."""
    return jnp.sign(weight).astype(jnp.bfloat16).T  # (in_features, out_features)


def _make_f32_kernel(tk, x_full_k):
    """Output dtype is f32: accumulate directly into the output block, which is
    VMEM-resident across the K grid axis (its block index ignores k)."""
    def kernel(x_ref, w_ref, b_ref, o_ref):
        k = pl.program_id(2)

        @pl.when(k == 0)
        def _init():
            o_ref[...] = jnp.broadcast_to(b_ref[...], o_ref.shape)

        if x_full_k:
            start = pl.multiple_of(k * tk, tk)
            x_tile = x_ref[:, pl.ds(start, tk)]
        else:
            x_tile = x_ref[...]

        # bf16 x bf16 -> f32 on the MXU (no in-kernel dtype sweeps).
        o_ref[...] += jnp.dot(x_tile, w_ref[...],
                              preferred_element_type=jnp.float32)

    return kernel


def _make_acc_kernel(tk, x_full_k):
    """Generic output dtype: f32 VMEM scratch accumulator, cast on the last K step."""
    def kernel(x_ref, w_ref, b_ref, o_ref, acc_ref):
        k = pl.program_id(2)

        @pl.when(k == 0)
        def _init():
            acc_ref[...] = jnp.broadcast_to(b_ref[...], acc_ref.shape)

        if x_full_k:
            start = pl.multiple_of(k * tk, tk)
            x_tile = x_ref[:, pl.ds(start, tk)]
        else:
            x_tile = x_ref[...]

        acc_ref[...] += jnp.dot(x_tile, w_ref[...],
                                preferred_element_type=jnp.float32)

        @pl.when(k == pl.num_programs(2) - 1)
        def _fin():
            o_ref[...] = acc_ref[...].astype(o_ref.dtype)

    return kernel


def bit_row_parallel_linear(x, weight, bias=None, *, prepared=False,
                            tm=256, tn=512, tk=2048,
                            x_panel_budget_bytes=8 << 20):
    """x: (..., in_features); weight: (out_features, in_features) raw, or the
    (in_features, out_features) bf16 output of prepare_bit_weight() if
    prepared=True; bias: (out_features,) or None."""
    orig_shape = x.shape

    if prepared:
        w_kn = weight                       # (K, N) bf16, already sign()'ed
        K, N = w_kn.shape
    else:
        N, K = weight.shape
        w_kn = prepare_bit_weight(weight)   # (K, N) bf16

    out_dtype = x.dtype
    x2d = x.reshape(-1, K).astype(jnp.bfloat16)   # bf16 activations for the MXU
    M = x2d.shape[0]

    if bias is None:
        b = jnp.zeros((1, N), jnp.float32)
    else:
        b = bias.astype(jnp.float32).reshape(1, N)

    # ---- tile selection ----------------------------------------------------
    # bf16 x: second-to-last block dim must be a multiple of 16 (sublane packing).
    tm_eff = tm if M >= tm else _round_up(M, 16)
    tn_eff = tn if N >= tn else N                 # full-dim block for small N
    if K <= tk:
        tk_eff, Kp, x_full_k = K, K, False        # single reduction step, no pad
    else:
        tk_eff = tk
        Kp = _round_up(K, tk_eff)
        # Keep the whole x row-panel VMEM resident if cheap: x is then DMA'd
        # once per M-block instead of once per (M, N) block.
        x_full_k = (tm_eff * Kp * 2) <= x_panel_budget_bytes

    # Only the K axis needs zero padding (reduction correctness). M/N edges are
    # handled by partial blocks with masked writes.
    if Kp != K:
        x2d = jnp.pad(x2d, ((0, 0), (0, Kp - K)))
        w_kn = jnp.pad(w_kn, ((0, Kp - K), (0, 0)))

    grid = (pl.cdiv(M, tm_eff), pl.cdiv(N, tn_eff), Kp // tk_eff)

    if x_full_k:
        x_spec = pl.BlockSpec((tm_eff, Kp), lambda i, j, k: (i, 0))
    else:
        x_spec = pl.BlockSpec((tm_eff, tk_eff), lambda i, j, k: (i, k))
    w_spec = pl.BlockSpec((tk_eff, tn_eff), lambda i, j, k: (k, j))
    b_spec = pl.BlockSpec((1, tn_eff), lambda i, j, k: (0, j))
    o_spec = pl.BlockSpec((tm_eff, tn_eff), lambda i, j, k: (i, j))

    out_is_f32 = (out_dtype == jnp.float32)
    if out_is_f32:
        kernel = _make_f32_kernel(tk_eff, x_full_k)
        scratch_shapes = []
    else:
        kernel = _make_acc_kernel(tk_eff, x_full_k)
        scratch_shapes = [pltpu.VMEM((tm_eff, tn_eff), jnp.float32)]

    # VMEM budget: double-buffered inputs/outputs (+ optional scratch), with
    # headroom, capped below v7x's 64 MiB per-TensorCore VMEM.
    x_bytes = tm_eff * (Kp if x_full_k else tk_eff) * 2
    w_bytes = tk_eff * tn_eff * 2
    o_bytes = tm_eff * tn_eff * 4
    b_bytes = tn_eff * 4
    working = 2 * (x_bytes + w_bytes + o_bytes + b_bytes)
    if not out_is_f32:
        working += tm_eff * tn_eff * 4
    vmem_limit = int(min(max(2 * working, 32 << 20), 48 << 20))

    out = pl.pallas_call(
        kernel,
        out_shape=jax.ShapeDtypeStruct((M, N), out_dtype),
        grid_spec=pltpu.PrefetchScalarGridSpec(
            num_scalar_prefetch=0,
            grid=grid,
            in_specs=[x_spec, w_spec, b_spec],
            out_specs=o_spec,
            scratch_shapes=scratch_shapes,
        ),
        compiler_params=pltpu.CompilerParams(
            dimension_semantics=("parallel", "parallel", "arbitrary"),
            vmem_limit_bytes=vmem_limit),
    )(x2d, w_kn, b)

    return out.reshape(*orig_shape[:-1], N)


if __name__ == "__main__":
    # Module config (world_size == 1 -> input_size_per_partition == in_features)
    in_features = 32
    out_features = 64
    batch, seq = 2, 8

    key = jax.random.PRNGKey(0)
    kw, kx, kb = jax.random.split(key, 3)

    # init_weights with binarization=True -> uniform(-1, 1); bias zero-initialized
    weight = jax.random.uniform(kw, (out_features, in_features),
                                dtype=jnp.float32, minval=-1.0, maxval=1.0)
    bias = jnp.zeros((out_features,), dtype=jnp.float32)
    x = jax.random.normal(kx, (batch, seq, in_features), dtype=jnp.float32)

    # Hot-path usage: prepare the binarized weight once, pass prepared=True.
    w_prepped = prepare_bit_weight(weight)
    y = bit_row_parallel_linear(x, w_prepped, bias, prepared=True)
    y = jax.block_until_ready(y)

    # Reference: the MXU computes bf16 x bf16 -> f32, so round x to bf16 first.
    x_bf = x.astype(jnp.bfloat16).astype(jnp.float32)
    y_ref = x_bf @ jnp.sign(weight).T + bias
    assert y.shape == (batch, seq, out_features)
    assert jnp.allclose(y, y_ref, atol=1e-3, rtol=1e-3), \
        float(jnp.max(jnp.abs(y - y_ref)))

    # Also exercise the unprepared path with a non-zero bias.
    bias2 = 0.1 * jax.random.normal(kb, (out_features,), dtype=jnp.float32)
    y2 = jax.block_until_ready(bit_row_parallel_linear(x, weight, bias2))
    y2_ref = x_bf @ jnp.sign(weight).T + bias2
    assert jnp.allclose(y2, y2_ref, atol=1e-3, rtol=1e-3), \
        float(jnp.max(jnp.abs(y2 - y2_ref)))

    print("KERNEL_OK")
</pallas_src>

<mosaic_0001>
module attributes {stable_mosaic.version = 11 : i64} {
  func.func @kernel(%arg0: i32, %arg1: i32, %arg2: i32, %arg3: memref<16x32xbf16, #tpu.memory_space<vmem>>, %arg4: memref<32x64xbf16, #tpu.memory_space<vmem>>, %arg5: memref<1x64xf32, #tpu.memory_space<vmem>>, %arg6: memref<16x64xf32, #tpu.memory_space<vmem>>) attributes {dimension_semantics = [#tpu.dimension_semantics<parallel>, #tpu.dimension_semantics<parallel>, #tpu.dimension_semantics<arbitrary>], iteration_bounds = array<i64: 1, 1, 1>, scalar_prefetch = 0 : i64, scratch_operands = 0 : i64, tpu.core_type = #tpu.core_type<tc>, window_params = [{transform_indices = @transform_0, window_bounds = array<i64: 16, 32>}, {transform_indices = @transform_1, window_bounds = array<i64: 32, 64>}, {transform_indices = @transform_2, window_bounds = array<i64: 1, 64>}, {transform_indices = @transform_3, window_bounds = array<i64: 16, 64>}]} {
    %c0_i32 = arith.constant 0 : i32
    %0 = arith.cmpi eq, %arg2, %c0_i32 : i32
    %1 = arith.extui %0 : i1 to i32
    %c0_i32_0 = arith.constant 0 : i32
    %2 = arith.cmpi ne, %1, %c0_i32_0 : i32
    scf.if %2 {
      %c0_8 = arith.constant 0 : index
      %c0_9 = arith.constant 0 : index
      %9 = vector.load %arg5[%c0_8, %c0_9] : memref<1x64xf32, #tpu.memory_space<vmem>>, vector<1x64xf32>
      %10 = vector.shape_cast %9 : vector<1x64xf32> to vector<1x64xf32>
      %11 = vector.broadcast %10 : vector<1x64xf32> to vector<16x64xf32>
      %c0_10 = arith.constant 0 : index
      %c0_11 = arith.constant 0 : index
      %12 = vector.load %arg6[%c0_10, %c0_11] : memref<16x64xf32, #tpu.memory_space<vmem>>, vector<16x64xf32>
      tpu.vector_store %arg6[%c0_10, %c0_11], %11 {strides = array<i32>} : memref<16x64xf32, #tpu.memory_space<vmem>>, vector<16x64xf32>,
    } else {
    }
    %c0 = arith.constant 0 : index
    %c0_1 = arith.constant 0 : index
    %3 = vector.load %arg3[%c0, %c0_1] : memref<16x32xbf16, #tpu.memory_space<vmem>>, vector<16x32xbf16>
    %c0_2 = arith.constant 0 : index
    %c0_3 = arith.constant 0 : index
    %4 = vector.load %arg6[%c0_2, %c0_3] : memref<16x64xf32, #tpu.memory_space<vmem>>, vector<16x64xf32>
    %c0_4 = arith.constant 0 : index
    %c0_5 = arith.constant 0 : index
    %5 = vector.load %arg4[%c0_4, %c0_5] : memref<32x64xbf16, #tpu.memory_space<vmem>>, vector<32x64xbf16>
    %cst = arith.constant dense<0.000000e+00> : vector<16x64xf32>
    %6 = tpu.matmul %3, %5, %cst {dimension_numbers = #tpu.dot_dimension_numbers<[1], [0], [0], [1], [0, 0, 1, 1], [], []>} : vector<16x32xbf16>, vector<32x64xbf16>, vector<16x64xf32> -> vector<16x64xf32>
    %7 = arith.addf %4, %6 : vector<16x64xf32>
    %c0_6 = arith.constant 0 : index
    %c0_7 = arith.constant 0 : index
    %8 = vector.load %arg6[%c0_6, %c0_7] : memref<16x64xf32, #tpu.memory_space<vmem>>, vector<16x64xf32>
    tpu.vector_store %arg6[%c0_6, %c0_7], %7 {strides = array<i32>} : memref<16x64xf32, #tpu.memory_space<vmem>>, vector<16x64xf32>,
    return
  }
  func.func @transform_0(%arg0: i32, %arg1: i32, %arg2: i32) -> (i32, i32) {
    %c0_i32 = arith.constant 0 : i32
    return %arg0, %arg2 : i32, i32
  }
  func.func @transform_1(%arg0: i32, %arg1: i32, %arg2: i32) -> (i32, i32) {
    %c0_i32 = arith.constant 0 : i32
    return %arg2, %arg1 : i32, i32
  }
  func.func @transform_2(%arg0: i32, %arg1: i32, %arg2: i32) -> (i32, i32) {
    %c0_i32 = arith.constant 0 : i32
    %c0_i32_0 = arith.constant 0 : i32
    return %c0_i32, %arg1 : i32, i32
  }
  func.func @transform_3(%arg0: i32, %arg1: i32, %arg2: i32) -> (i32, i32) {
    %c0_i32 = arith.constant 0 : i32
    return %arg0, %arg1 : i32, i32
  }
}

</mosaic_0001>

<llo_original>
// kernel: tpu_custom_call.1
$region0: #{tpu_custom_call.1}
  #allocation0 [shape = 'u32[]', space=smem, size = 0x4, offset = 0x4, fixed_abs, tag = 'smem constant byte address 0x4 - core index']
  #allocation1 [shape = 'u32[72,128]{1,0:T(1,128)}', space=vmem, size = 0x9000, scoped, tag = 'internal scratch']
  %s0 = inlined_call_operand.hbm [shape: bf16[16,32], index: 0, kind: input, shape index: {}]
  %s1 = inlined_call_operand.hbm [shape: bf16[32,64], index: 1, kind: input, shape index: {}]
  %s2 = inlined_call_operand.vmem [shape: f32[1,64], index: 2, kind: input, shape index: {}]
  %s3 = inlined_call_operand.hbm [shape: f32[16,64], index: 3, kind: output, shape index: {}]
  %s4 = sld [smem:[#allocation0]]
  $region34: #{tpu_custom_call.1} parent=0
    _
  %s6 = ssub.s32 1, %s4
  %s7 = scalar_select 0, %s6, %s4
  $region1: #{tpu_custom_call.1} parent=0
    #allocation2 [shape = 'u8[4096]{0}', space=vmem, size = 0x1000, scoped, tag = 'input window, operand 0, single buffered']
    #allocation3 [shape = 's32[1]{0}', space=sflag, size = 0x4, scoped, tag = 'scoped memory for tpu_custom_call.1']
    #allocation4 [shape = 's32[1]{0}', space=sflag, size = 0x4, scoped, tag = 'scoped memory for tpu_custom_call.1']
    #allocation5 [shape = 'u8[8192]{0}', space=vmem, size = 0x2000, scoped, tag = 'input window, operand 1, single buffered']
    #allocation6 [shape = 's32[1]{0}', space=sflag, size = 0x4, scoped, tag = 'scoped memory for tpu_custom_call.1']
    #allocation7 [shape = 'u8[8192]{0}', space=vmem, size = 0x2000, scoped, tag = 'output window, operand 0, single buffered']
    %8 = vsyncpa [#allocation3], 0
    %9 = vsyncpa [#allocation6], 0
    %10 = vsyncpa [#allocation4], 0
    // Predicated region
    $region2: #{tpu_custom_call.1} parent=1 // pred_check
      _
    $region3: #{tpu_custom_call.1} parent=1 // pred_check_branch
      %12 = sbr.rel (0) target = $region5
    $region4: #{tpu_custom_call.1} parent=1 // pred_region
      %14 = vsyncadd [#allocation3], 0
      %s15 = sshll.u32 %s0, 4
      %s16 = int_to_ptr.hbm [resolvable:$true] %s15
      %s17 = sshll.u32 [#allocation2], 4
      %s18 = int_to_ptr.vmem [resolvable:$true] %s17
      %23 = dma.hbm_to_vmem [thread:$0]  %s16, 128, %s18, [#allocation3], 64, 64, 4
    $region5: #{tpu_custom_call.1} parent=1 // pred_fallthru
      _
    // Predicated region
    $region6: #{tpu_custom_call.1} parent=1 // pred_check
      _
    $region7: #{tpu_custom_call.1} parent=1 // pred_check_branch
      %25 = sbr.rel (0) target = $region9
    $region8: #{tpu_custom_call.1} parent=1 // pred_region
      %27 = vsyncadd [#allocation6], 0
      %s28 = sshll.u32 %s1, 4
      %s29 = int_to_ptr.hbm [resolvable:$true] %s28
      %s30 = sshll.u32 [#allocation5], 4
      %s31 = int_to_ptr.vmem [resolvable:$true] %s30
      %36 = dma.hbm_to_vmem [thread:$0]  %s29, 256, %s31, [#allocation6], 64, 64, 4
    $region9: #{tpu_custom_call.1} parent=1 // pred_fallthru
      _
    // Predicated region
    $region10: #{tpu_custom_call.1} parent=1 // pred_check
      _
    $region11: #{tpu_custom_call.1} parent=1 // pred_check_branch
      %38 = sbr.rel (0) target = $region13
    $region12: #{tpu_custom_call.1} parent=1 // pred_region
      _
    $region13: #{tpu_custom_call.1} parent=1 // pred_fallthru
      _
    // Predicated region
    $region14: #{tpu_custom_call.1} parent=1 // pred_check
      _
    $region15: #{tpu_custom_call.1} parent=1 // pred_check_branch
      %40 = sbr.rel (0) target = $region17
    $region16: #{tpu_custom_call.1} parent=1 // pred_region
      %42 = dma.done [#allocation3], 128
    $region17: #{tpu_custom_call.1} parent=1 // pred_fallthru
      _
    // Predicated region
    $region18: #{tpu_custom_call.1} parent=1 // pred_check
      _
    $region19: #{tpu_custom_call.1} parent=1 // pred_check_branch
      %44 = sbr.rel (0) target = $region21
    $region20: #{tpu_custom_call.1} parent=1 // pred_region
      %46 = dma.done [#allocation6], 256
    $region21: #{tpu_custom_call.1} parent=1 // pred_fallthru
      _
    %p48 = scmp.eq.s32.totalorder 0, 0
    // Predicated region
    $region22: #{tpu_custom_call.1} parent=1 // pred_check
      %p49 = pneg %p48
    $region23: #{tpu_custom_call.1} parent=1 // pred_check_branch
      %51 = sbr.rel (%p49) target = $region25
    $region24: #{tpu_custom_call.1} parent=1 // pred_region
      %v52 = vld [vmem:[%s2] sm:$0x1]
      %v54 = vperm.slane %v52, 0
      %vm56 = vcmask 523264
      %57 = vst.msk [vmem:[#allocation7] sm:$0xff] %vm56, %v54
      %58 = vst.msk [vmem:[#allocation7 + $0x8] sm:$0xff] %vm56, %v54
    $region25: #{tpu_custom_call.1} parent=1 // pred_fallthru
      _
    %v59 = vld [vmem:[#allocation2] sm:$0xf]
    %v60 = vld [vmem:[#allocation2 + $0x4] sm:$0xf]
    %v61 = vld [vmem:[#allocation7] sm:$0xff]
    %v62 = vld [vmem:[#allocation7 + $0x8] sm:$0xff]
    %v63 = vld [vmem:[#allocation5] sm:$0xf]
    %v64 = vld [vmem:[#allocation5 + $0x4] sm:$0xf]
    %v65 = vld [vmem:[#allocation5 + $0x8] sm:$0xf]
    %v66 = vld [vmem:[#allocation5 + $0xc] sm:$0xf]
    %v69 = vunpack.c.l.b16 %v59
    %v70 = vunpack.c.l.b16 %v60
    %v71 = vpack.c.b16 %v70, %v69
    %v76 = vunpack.c.l.b16 %v63
    %v77 = vunpack.c.l.b16 %v64
    %v78 = vunpack.c.l.b16 %v65
    %v79 = vunpack.c.l.b16 %v66
    %v80 = vpack.c.b16 %v77, %v76
    %v81 = vpack.c.b16 %v79, %v78
    %vm84 = vcmask 261120
    %v86 = vsel %vm84, %v71, 0
    %88 = vmatpush.bf16.msra.mxu0 0
    %89 = vmatpush.bf16.msra.mxu0 0
    %90 = vmatpush.bf16.msra.mxu0 0
    %91 = vmatpush.bf16.msra.mxu0 0
    %92 = vmatpush.bf16.msra.mxu0 0
    %93 = vmatpush.bf16.msra.mxu0 0
    %94 = vmatpush.bf16.msra.mxu0 %v81
    %95 = vmatpush.bf16.msra.mxu0 %v80
    %96 = vmatmul.bf16.gmra.mxu0 %v86
    %v97 = vpop.f32.mrf.mxu0
    %v98 = vadd.f32 0.0, %v97
    %v99 = vpop.f32.mrf.mxu0
    %v100 = vadd.f32 0.0, %v99
    %101 = vdwg.mxu0
    %v102 = vadd.f32 %v61, %v98
    %v103 = vadd.f32 %v62, %v100
    %vm104 = vcmask 523264
    %105 = vst.msk [vmem:[#allocation7] sm:$0xff] %vm104, %v102
    %106 = vst.msk [vmem:[#allocation7 + $0x8] sm:$0xff] %vm104, %v103
    // Predicated region
    $region26: #{tpu_custom_call.1} parent=1 // pred_check
      _
    $region27: #{tpu_custom_call.1} parent=1 // pred_check_branch
      %108 = sbr.rel (0) target = $region29
    $region28: #{tpu_custom_call.1} parent=1 // pred_region
      %110 = vsyncadd [#allocation4], 0
      %s111 = sshll.u32 [#allocation7], 4
      %s112 = int_to_ptr.vmem [resolvable:$true] %s111
      %s113 = sshll.u32 %s3, 4
      %s114 = int_to_ptr.hbm [resolvable:$true] %s113
      %119 = dma.vmem_to_hbm [thread:$0]  %s112, 256, %s114, [#allocation4], 128, 128, 8
    $region29: #{tpu_custom_call.1} parent=1 // pred_fallthru
      _
    // Predicated region
    $region30: #{tpu_custom_call.1} parent=1 // pred_check
      _
    $region31: #{tpu_custom_call.1} parent=1 // pred_check_branch
      %121 = sbr.rel (0) target = $region33
    $region32: #{tpu_custom_call.1} parent=1 // pred_region
      %123 = dma.done [#allocation4], 256
    $region33: #{tpu_custom_call.1} parent=1 // pred_fallthru
      _
    %124 = vsyncpa [#allocation3], 1
    %125 = vsyncpa [#allocation6], 1
    %126 = vsyncpa [#allocation4], 1

</llo_original>
